<compile_context>
chip_gen: v7x
topology: tpu7x:2x2x1
jax: 0.10.0
libtpu: 0.0.40
codegen_flags: <defaults>
</compile_context>

<pallas_src>
import functools
import math

import jax
import jax.numpy as jnp
from jax.experimental import pallas as pl
from jax.experimental.pallas import tpu as pltpu

_INV_SQRT2 = 0.7071067811865476


def _mlp_kernel(x_ref, w1_ref, b1_ref, w2_ref, b2_ref, o_ref, acc_ref):
    # Grid: (i = token tiles ["parallel"], k = hidden tiles ["arbitrary"]).
    # x_ref : (tm, C_in)    w1_ref: (C_in, th)   b1_ref: (1, th)
    # w2_ref: (th, C_out)   b2_ref: (1, C_out)   o_ref : (tm, C_out)
    # acc_ref: (tm, C_out) f32 accumulator over the hidden reduction axis.
    k = pl.program_id(1)

    @pl.when(k == 0)
    def _():
        acc_ref[...] = jnp.zeros_like(acc_ref)

    # fc1 partial for this hidden tile: native-dtype MXU inputs, f32 accumulate.
    h = jnp.dot(x_ref[...], w1_ref[...], preferred_element_type=jnp.float32)
    h = h + b1_ref[...].astype(jnp.float32)

    # Exact erf GELU (matches torch.nn.GELU() default), computed in f32.
    h = 0.5 * h * (1.0 + jax.lax.erf(h * _INV_SQRT2))

    # Dropout(p=0.0) is identity -> omitted.

    # fc2 partial: this hidden tile's contribution to the full output width.
    acc_ref[...] += jnp.dot(h.astype(w2_ref.dtype), w2_ref[...],
                            preferred_element_type=jnp.float32)

    @pl.when(k == pl.num_programs(1) - 1)
    def _():
        o_ref[...] = (acc_ref[...] + b2_ref[...].astype(jnp.float32)
                      ).astype(o_ref.dtype)


def _round_up(x, m):
    return (x + m - 1) // m * m


def _vmem_budget_bytes():
    # ~75% of physical VMEM; conservative fallback = 64 MiB (v7x per-core).
    try:
        cap = int(pltpu.get_tpu_info().vmem_capacity_bytes)
    except Exception:
        cap = 64 * 1024 * 1024
    return int(cap) * 3 // 4


def _choose_tm(T):
    if T <= 64:
        return _round_up(max(T, 8), 8)
    best_tm, best_pad = None, None
    for tm in (512, 384, 256, 192, 128, 64):   # descending -> ties keep larger tm
        pad = _round_up(T, tm) - T
        if best_pad is None or pad < best_pad:
            best_tm, best_pad = tm, pad
    return best_tm


def _choose_tiles(T, C_in, H, C_out, in_bytes, out_bytes, budget):
    tm = _choose_tm(T)
    # Megacore (v7x has 2 TCs): give the "parallel" token axis >= 2 blocks.
    if _round_up(T, tm) // tm == 1 and tm >= 128:
        tm //= 2

    th_cands = [t for t in (1024, 512, 256, 128) if H % t == 0] or [H]

    def footprint(tm_, th_, wbuf):
        return (2 * tm_ * C_in * in_bytes            # x tile (double buffered)
                + wbuf * C_in * th_ * in_bytes       # w1 tile
                + wbuf * th_ * 4                     # b1 tile
                + wbuf * th_ * C_out * in_bytes      # w2 tile
                + 2 * C_out * 4                      # b2
                + 2 * tm_ * C_out * out_bytes        # output tile
                + tm_ * C_out * 4                    # f32 accumulator
                + 2 * tm_ * th_ * 4)                 # headroom for h intermediate

    th = None
    for cand in th_cands:
        if footprint(tm, cand, 2) <= budget:
            th = cand
            break
    if th is None:
        th = th_cands[-1]
        while tm > 8 and footprint(tm, th, 2) > budget:
            tm = max(8, (tm // 2) // 8 * 8)

    # Third weight buffer helps memory-bound small-T shapes (v5e's weak HBM)
    # when the k loop is long enough and VMEM allows.
    k_steps = max(1, H // th)
    grid_i = _round_up(T, tm) // tm
    weight_buffers = 3 if (k_steps >= 3 and grid_i <= 2
                           and footprint(tm, th, 3) <= budget) else 2

    return tm, th, weight_buffers, footprint(tm, th, weight_buffers)


@functools.partial(jax.jit, static_argnames=("mxu_dtype",))
def mlp_pallas(x, w1, b1, w2, b2, *, mxu_dtype=jnp.bfloat16):
    """Fused MLP: GELU(x @ w1 + b1) @ w2 + b2.

    x : (..., C_in)
    w1: (C_in, H)   b1: (H,)       (weights stored transposed vs. nn.Linear)
    w2: (H, C_out)  b2: (C_out,)
    mxu_dtype: dtype fed to the MXU (f32 operands are cast once in the wrapper;
               accumulation stays f32).  Pass None to keep the input dtype.
    """
    orig_shape = x.shape
    C_in = orig_shape[-1]
    H = w1.shape[1]
    C_out = w2.shape[1]
    out_dtype = x.dtype

    if mxu_dtype is not None and jnp.dtype(x.dtype) == jnp.float32:
        compute_dtype = jnp.dtype(mxu_dtype)
    else:
        compute_dtype = jnp.dtype(x.dtype)

    x2d = x.reshape(-1, C_in).astype(compute_dtype)
    w1c = w1.astype(compute_dtype)
    w2c = w2.astype(compute_dtype)
    b1_2d = b1.reshape(1, H).astype(jnp.float32)
    b2_2d = b2.reshape(1, C_out).astype(jnp.float32)

    T = x2d.shape[0]
    in_bytes = compute_dtype.itemsize
    out_bytes = jnp.dtype(out_dtype).itemsize
    budget = _vmem_budget_bytes()

    tm, th, weight_buffers, fp_bytes = _choose_tiles(
        T, C_in, H, C_out, in_bytes, out_bytes, budget)

    T_pad = _round_up(T, tm)
    if T_pad != T:
        x2d = jnp.pad(x2d, ((0, T_pad - T), (0, 0)))

    grid = (T_pad // tm, max(1, H // th))

    w_spec_kwargs = {}
    if weight_buffers != 2:
        w_spec_kwargs = dict(pipeline_mode=pl.Buffered(weight_buffers))

    in_specs = [
        pl.BlockSpec((tm, C_in), lambda i, k: (i, 0)),                    # x
        pl.BlockSpec((C_in, th), lambda i, k: (0, k), **w_spec_kwargs),   # w1
        pl.BlockSpec((1, th), lambda i, k: (0, k)),                       # b1
        pl.BlockSpec((th, C_out), lambda i, k: (k, 0), **w_spec_kwargs),  # w2
        pl.BlockSpec((1, C_out), lambda i, k: (0, 0)),                    # b2
    ]

    vmem_limit = int(min(budget, max(2 * fp_bytes, 32 * 1024 * 1024)))

    cost = pl.CostEstimate(
        flops=2 * T_pad * C_in * H + 2 * T_pad * H * C_out,
        transcendentals=T_pad * H,
        bytes_accessed=(T_pad * C_in * in_bytes
                        + grid[0] * (C_in * H + H * C_out) * in_bytes
                        + H * 4 + C_out * 4
                        + T_pad * C_out * out_bytes))

    out2d = pl.pallas_call(
        _mlp_kernel,
        out_shape=jax.ShapeDtypeStruct((T_pad, C_out), out_dtype),
        grid_spec=pltpu.PrefetchScalarGridSpec(
            num_scalar_prefetch=0,
            grid=grid,
            in_specs=in_specs,
            out_specs=pl.BlockSpec((tm, C_out), lambda i, k: (i, 0)),
            scratch_shapes=[pltpu.VMEM((tm, C_out), jnp.float32)],
        ),
        compiler_params=pltpu.CompilerParams(
            dimension_semantics=("parallel", "arbitrary"),
            vmem_limit_bytes=vmem_limit),
        cost_estimate=cost,
    )(x2d, w1c, b1_2d, w2c, b2_2d)

    if T_pad != T:
        out2d = out2d[:T]
    return out2d.reshape(*orig_shape[:-1], C_out)


def mlp_reference(x, w1, b1, w2, b2, compute_dtype=jnp.bfloat16):
    f32 = jnp.float32
    xc = x.astype(compute_dtype).astype(f32)
    w1c = w1.astype(compute_dtype).astype(f32)
    w2c = w2.astype(compute_dtype).astype(f32)
    h = xc @ w1c + b1.astype(f32)
    h = 0.5 * h * (1.0 + jax.lax.erf(h * _INV_SQRT2))
    h = h.astype(compute_dtype).astype(f32)
    y = h @ w2c + b2.astype(f32)
    return y.astype(x.dtype)


if __name__ == "__main__":
    key = jax.random.PRNGKey(0)
    k_x, k_w1, k_b1, k_w2, k_b2 = jax.random.split(key, 5)

    # Small shapes consistent with a Swin MLP block: batch=2, seq=8 tokens,
    # in_features=32, hidden_features=64, out_features=32.
    # NOTE: at these toy sizes plain XLA would win; the kernel targets real
    # MLP widths (C, H multiples of 128) where it is MXU-bound.
    B, N, C_in = 2, 8, 32
    H = 64
    C_out = C_in

    x = jax.random.normal(k_x, (B, N, C_in), dtype=jnp.float32)

    bound1 = 1.0 / math.sqrt(C_in)
    bound2 = 1.0 / math.sqrt(H)
    w1 = jax.random.uniform(k_w1, (C_in, H), minval=-bound1, maxval=bound1,
                            dtype=jnp.float32)
    b1 = jax.random.uniform(k_b1, (H,), minval=-bound1, maxval=bound1,
                            dtype=jnp.float32)
    w2 = jax.random.uniform(k_w2, (H, C_out), minval=-bound2, maxval=bound2,
                            dtype=jnp.float32)
    b2 = jax.random.uniform(k_b2, (C_out,), minval=-bound2, maxval=bound2,
                            dtype=jnp.float32)

    out = mlp_pallas(x, w1, b1, w2, b2)
    jax.block_until_ready(out)

    ref_matched = mlp_reference(x, w1, b1, w2, b2, compute_dtype=jnp.bfloat16)
    ref_f32 = mlp_reference(x, w1, b1, w2, b2, compute_dtype=jnp.float32)

    assert out.shape == (B, N, C_out)
    assert jnp.allclose(out, ref_matched, atol=1e-2, rtol=1e-2), \
        "mismatch vs bf16-matched reference"
    assert jnp.allclose(out, ref_f32, atol=5e-2, rtol=5e-2), \
        "mismatch vs f32 reference"

    print("KERNEL_OK")
</pallas_src>

<mosaic_0001>
module attributes {stable_mosaic.version = 11 : i64} {
  func.func @_mlp_kernel(%arg0: i32, %arg1: i32, %arg2: memref<16x32xbf16, #tpu.memory_space<vmem>>, %arg3: memref<32x64xbf16, #tpu.memory_space<vmem>>, %arg4: memref<1x64xf32, #tpu.memory_space<vmem>>, %arg5: memref<64x32xbf16, #tpu.memory_space<vmem>>, %arg6: memref<1x32xf32, #tpu.memory_space<vmem>>, %arg7: memref<16x32xf32, #tpu.memory_space<vmem>>, %arg8: memref<16x32xf32, #tpu.memory_space<vmem>>) attributes {dimension_semantics = [#tpu.dimension_semantics<parallel>, #tpu.dimension_semantics<arbitrary>], iteration_bounds = array<i64: 1, 1>, scalar_prefetch = 0 : i64, scratch_operands = 1 : i64, tpu.core_type = #tpu.core_type<tc>, window_params = [{transform_indices = @transform_0, window_bounds = array<i64: 16, 32>}, {transform_indices = @transform_1, window_bounds = array<i64: 32, 64>}, {transform_indices = @transform_2, window_bounds = array<i64: 1, 64>}, {transform_indices = @transform_3, window_bounds = array<i64: 64, 32>}, {pipeline_mode = #tpu.pipeline_mode<synchronous>, transform_indices = @transform_4, window_bounds = array<i64: 1, 32>}, {transform_indices = @transform_5, window_bounds = array<i64: 16, 32>}]} {
    %c0_i32 = arith.constant 0 : i32
    %0 = arith.cmpi eq, %arg1, %c0_i32 : i32
    %1 = arith.extui %0 : i1 to i32
    %c0_i32_0 = arith.constant 0 : i32
    %2 = arith.cmpi ne, %1, %c0_i32_0 : i32
    scf.if %2 {
      %cst_18 = arith.constant 0.000000e+00 : f32
      %26 = vector.broadcast %cst_18 : f32 to vector<16x32xf32>
      %c0_19 = arith.constant 0 : index
      %c0_20 = arith.constant 0 : index
      %27 = vector.load %arg8[%c0_19, %c0_20] : memref<16x32xf32, #tpu.memory_space<vmem>>, vector<16x32xf32>
      tpu.vector_store %arg8[%c0_19, %c0_20], %26 {strides = array<i32>} : memref<16x32xf32, #tpu.memory_space<vmem>>, vector<16x32xf32>,
    } else {
    }
    %c0 = arith.constant 0 : index
    %c0_1 = arith.constant 0 : index
    %3 = vector.load %arg2[%c0, %c0_1] : memref<16x32xbf16, #tpu.memory_space<vmem>>, vector<16x32xbf16>
    %c0_2 = arith.constant 0 : index
    %c0_3 = arith.constant 0 : index
    %4 = vector.load %arg3[%c0_2, %c0_3] : memref<32x64xbf16, #tpu.memory_space<vmem>>, vector<32x64xbf16>
    %cst = arith.constant dense<0.000000e+00> : vector<16x64xf32>
    %5 = tpu.matmul %3, %4, %cst {dimension_numbers = #tpu.dot_dimension_numbers<[1], [0], [0], [1], [0, 0, 1, 1], [], []>} : vector<16x32xbf16>, vector<32x64xbf16>, vector<16x64xf32> -> vector<16x64xf32>
    %c0_4 = arith.constant 0 : index
    %c0_5 = arith.constant 0 : index
    %6 = vector.load %arg4[%c0_4, %c0_5] : memref<1x64xf32, #tpu.memory_space<vmem>>, vector<1x64xf32>
    %7 = vector.broadcast %6 : vector<1x64xf32> to vector<16x64xf32>
    %8 = arith.addf %5, %7 : vector<16x64xf32>
    %cst_6 = arith.constant 5.000000e-01 : f32
    %9 = vector.broadcast %cst_6 : f32 to vector<16x64xf32>
    %10 = arith.mulf %9, %8 : vector<16x64xf32>
    %cst_7 = arith.constant 0.707106769 : f32
    %11 = vector.broadcast %cst_7 : f32 to vector<16x64xf32>
    %12 = arith.mulf %8, %11 : vector<16x64xf32>
    %13 = math.erf %12 : vector<16x64xf32>
    %cst_8 = arith.constant 1.000000e+00 : f32
    %14 = vector.broadcast %cst_8 : f32 to vector<16x64xf32>
    %15 = arith.addf %14, %13 : vector<16x64xf32>
    %16 = arith.mulf %10, %15 : vector<16x64xf32>
    %c0_9 = arith.constant 0 : index
    %c0_10 = arith.constant 0 : index
    %17 = vector.load %arg8[%c0_9, %c0_10] : memref<16x32xf32, #tpu.memory_space<vmem>>, vector<16x32xf32>
    %18 = arith.truncf %16 : vector<16x64xf32> to vector<16x64xbf16>
    %c0_11 = arith.constant 0 : index
    %c0_12 = arith.constant 0 : index
    %19 = vector.load %arg5[%c0_11, %c0_12] : memref<64x32xbf16, #tpu.memory_space<vmem>>, vector<64x32xbf16>
    %cst_13 = arith.constant dense<0.000000e+00> : vector<16x32xf32>
    %20 = tpu.matmul %18, %19, %cst_13 {dimension_numbers = #tpu.dot_dimension_numbers<[1], [0], [0], [1], [0, 0, 1, 1], [], []>} : vector<16x64xbf16>, vector<64x32xbf16>, vector<16x32xf32> -> vector<16x32xf32>
    %21 = arith.addf %17, %20 : vector<16x32xf32>
    %c0_14 = arith.constant 0 : index
    %c0_15 = arith.constant 0 : index
    %22 = vector.load %arg8[%c0_14, %c0_15] : memref<16x32xf32, #tpu.memory_space<vmem>>, vector<16x32xf32>
    tpu.vector_store %arg8[%c0_14, %c0_15], %21 {strides = array<i32>} : memref<16x32xf32, #tpu.memory_space<vmem>>, vector<16x32xf32>,
    %c0_i32_16 = arith.constant 0 : i32
    %23 = arith.cmpi eq, %arg1, %c0_i32_16 : i32
    %24 = arith.extui %23 : i1 to i32
    %c0_i32_17 = arith.constant 0 : i32
    %25 = arith.cmpi ne, %24, %c0_i32_17 : i32
    scf.if %25 {
      %c0_18 = arith.constant 0 : index
      %c0_19 = arith.constant 0 : index
      %26 = vector.load %arg8[%c0_18, %c0_19] : memref<16x32xf32, #tpu.memory_space<vmem>>, vector<16x32xf32>
      %c0_20 = arith.constant 0 : index
      %c0_21 = arith.constant 0 : index
      %27 = vector.load %arg6[%c0_20, %c0_21] : memref<1x32xf32, #tpu.memory_space<vmem>>, vector<1x32xf32>
      %28 = vector.broadcast %27 : vector<1x32xf32> to vector<16x32xf32>
      %29 = arith.addf %26, %28 : vector<16x32xf32>
      %c0_22 = arith.constant 0 : index
      %c0_23 = arith.constant 0 : index
      %30 = vector.load %arg7[%c0_22, %c0_23] : memref<16x32xf32, #tpu.memory_space<vmem>>, vector<16x32xf32>
      tpu.vector_store %arg7[%c0_22, %c0_23], %29 {strides = array<i32>} : memref<16x32xf32, #tpu.memory_space<vmem>>, vector<16x32xf32>,
    } else {
    }
    return
  }
  func.func @transform_0(%arg0: i32, %arg1: i32) -> (i32, i32) {
    %c0_i32 = arith.constant 0 : i32
    %c0_i32_0 = arith.constant 0 : i32
    return %arg0, %c0_i32 : i32, i32
  }
  func.func @transform_1(%arg0: i32, %arg1: i32) -> (i32, i32) {
    %c0_i32 = arith.constant 0 : i32
    %c0_i32_0 = arith.constant 0 : i32
    return %c0_i32, %arg1 : i32, i32
  }
  func.func @transform_2(%arg0: i32, %arg1: i32) -> (i32, i32) {
    %c0_i32 = arith.constant 0 : i32
    %c0_i32_0 = arith.constant 0 : i32
    return %c0_i32, %arg1 : i32, i32
  }
  func.func @transform_3(%arg0: i32, %arg1: i32) -> (i32, i32) {
    %c0_i32 = arith.constant 0 : i32
    %c0_i32_0 = arith.constant 0 : i32
    return %arg1, %c0_i32 : i32, i32
  }
  func.func @transform_4(%arg0: i32, %arg1: i32) -> (i32, i32) {
    %c0_i32 = arith.constant 0 : i32
    %c0_i32_0 = arith.constant 0 : i32
    %c0_i32_1 = arith.constant 0 : i32
    return %c0_i32, %c0_i32_0 : i32, i32
  }
  func.func @transform_5(%arg0: i32, %arg1: i32) -> (i32, i32) {
    %c0_i32 = arith.constant 0 : i32
    %c0_i32_0 = arith.constant 0 : i32
    return %arg0, %c0_i32 : i32, i32
  }
}

</mosaic_0001>

<llo_original>
// kernel: mlp_pallas.1
$region0: #{mlp_pallas.1}
  #allocation0 [shape = 'u32[]', space=smem, size = 0x4, offset = 0x4, fixed_abs, tag = 'smem constant byte address 0x4 - core index']
  #allocation1 [shape = 'u32[144,128]{1,0:T(1,128)}', space=vmem, size = 0x12000, scoped, tag = 'internal scratch']
  #allocation2 [shape = 'f32[16,32]{1,0:T(8,128)}', space=vmem, size = 0x2000, scoped, tag = 'scratch operand']
  %s0 = inlined_call_operand.vmem [shape: bf16[16,32], index: 0, kind: input, shape index: {}]
  %s1 = inlined_call_operand.vmem [shape: bf16[32,64], index: 1, kind: input, shape index: {}]
  %s2 = inlined_call_operand.vmem [shape: f32[1,64], index: 2, kind: input, shape index: {}]
  %s3 = inlined_call_operand.vmem [shape: bf16[64,32], index: 3, kind: input, shape index: {}]
  %s4 = inlined_call_operand.vmem [shape: f32[1,32], index: 4, kind: input, shape index: {}]
  %s5 = inlined_call_operand.hbm [shape: f32[16,32], index: 5, kind: output, shape index: {}]
  %s6 = sld [smem:[#allocation0]]
  $region38: #{mlp_pallas.1} parent=0
    _
  %s8 = ssub.s32 1, %s6
  %s9 = scalar_select 0, %s8, %s6
  $region1: #{mlp_pallas.1} parent=0
    #allocation3 [shape = 'u8[8192]{0}', space=vmem, size = 0x2000, scoped, tag = 'output window, operand 0, single buffered']
    #allocation4 [shape = 's32[1]{0}', space=sflag, size = 0x4, scoped, tag = 'scoped memory for mlp_pallas.1']
    %10 = vsyncpa [#allocation4], 0
    // Predicated region
    $region2: #{mlp_pallas.1} parent=1 // pred_check
      _
    $region3: #{mlp_pallas.1} parent=1 // pred_check_branch
      %12 = sbr.rel (0) target = $region5
    $region4: #{mlp_pallas.1} parent=1 // pred_region
      _
    $region5: #{mlp_pallas.1} parent=1 // pred_fallthru
      _
    // Predicated region
    $region6: #{mlp_pallas.1} parent=1 // pred_check
      _
    $region7: #{mlp_pallas.1} parent=1 // pred_check_branch
      %14 = sbr.rel (0) target = $region9
    $region8: #{mlp_pallas.1} parent=1 // pred_region
      _
    $region9: #{mlp_pallas.1} parent=1 // pred_fallthru
      _
    // Predicated region
    $region10: #{mlp_pallas.1} parent=1 // pred_check
      _
    $region11: #{mlp_pallas.1} parent=1 // pred_check_branch
      %16 = sbr.rel (0) target = $region13
    $region12: #{mlp_pallas.1} parent=1 // pred_region
      _
    $region13: #{mlp_pallas.1} parent=1 // pred_fallthru
      _
    // Predicated region
    $region14: #{mlp_pallas.1} parent=1 // pred_check
      _
    $region15: #{mlp_pallas.1} parent=1 // pred_check_branch
      %18 = sbr.rel (0) target = $region17
    $region16: #{mlp_pallas.1} parent=1 // pred_region
      _
    $region17: #{mlp_pallas.1} parent=1 // pred_fallthru
      _
    // Predicated region
    $region18: #{mlp_pallas.1} parent=1 // pred_check
      _
    $region19: #{mlp_pallas.1} parent=1 // pred_check_branch
      %20 = sbr.rel (0) target = $region21
    $region20: #{mlp_pallas.1} parent=1 // pred_region
      _
    $region21: #{mlp_pallas.1} parent=1 // pred_fallthru
      _
    %p22 = scmp.eq.s32.totalorder 0, 0
    // Predicated region
    $region22: #{mlp_pallas.1} parent=1 // pred_check
      %p23 = pneg %p22
    $region23: #{mlp_pallas.1} parent=1 // pred_check_branch
      %25 = sbr.rel (%p23) target = $region25
    $region24: #{mlp_pallas.1} parent=1 // pred_region
      %vm26 = vcmask 261120
      %27 = vst.msk [vmem:[#allocation2] sm:$0xff] %vm26, 0.0
      %28 = vst.msk [vmem:[#allocation2 + $0x8] sm:$0xff] %vm26, 0.0
    $region25: #{mlp_pallas.1} parent=1 // pred_fallthru
      _
    %v29 = vld [vmem:[%s0] sm:$0xf]
    %v30 = vld [vmem:[%s0 + $0x4] sm:$0xf]
    %v31 = vld [vmem:[%s1] sm:$0xf]
    %v32 = vld [vmem:[%s1 + $0x4] sm:$0xf]
    %v33 = vld [vmem:[%s1 + $0x8] sm:$0xf]
    %v34 = vld [vmem:[%s1 + $0xc] sm:$0xf]
    %v35 = vld [vmem:[%s2] sm:$0x1]
    %v37 = vlaneseq
    %v38 = vshrl.u32 %v37, 7
    %v39 = vsub.s32 0, %v38
    %v40 = vrot.slane %v35, %v39
    %v44 = vunpack.c.l.b16 %v29
    %v45 = vunpack.c.l.b16 %v30
    %v46 = vpack.c.b16 %v45, %v44
    %v51 = vunpack.c.l.b16 %v31
    %v52 = vunpack.c.l.b16 %v32
    %v53 = vunpack.c.l.b16 %v33
    %v54 = vunpack.c.l.b16 %v34
    %v55 = vpack.c.b16 %v52, %v51
    %v56 = vpack.c.b16 %v54, %v53
    %vm59 = vcmask 261120
    %v61 = vsel %vm59, %v46, 0
    %63 = vmatprep.subr.bf16.mxu0 0
    %64 = vmatpush1.bf16.msra.mxu0 %v55
    %65 = vmatprep.subr.bf16.mxu0 0
    %66 = vmatpush1.bf16.msra.mxu0 %v56
    %67 = vmatprep.subr.bf16.mxu0 0
    %68 = vmatpush1.bf16.msra.mxu0 0
    %69 = vmatprep.subr.bf16.mxu0 0
    %70 = vmatpush1.bf16.msra.mxu0 0
    %71 = vmatprep.subr.bf16.mxu0 0
    %72 = vmatpush1.bf16.msra.mxu0 0
    %73 = vmatprep.subr.bf16.mxu0 0
    %74 = vmatpush1.bf16.msra.mxu0 0
    %75 = vmatprep.subr.bf16.mxu0 0
    %76 = vmatpush1.bf16.msra.mxu0 0
    %77 = vmatprep.subr.bf16.mxu0 0
    %78 = vmatpush1.bf16.msra.mxu0 0
    %79 = vmatprep.subr.bf16.mxu0 0
    %80 = vmatpush1.bf16.msra.mxu0 0
    %81 = vmatprep.subr.bf16.mxu0 0
    %82 = vmatpush1.bf16.msra.mxu0 0
    %83 = vmatprep.subr.bf16.mxu0 0
    %84 = vmatpush1.bf16.msra.mxu0 0
    %85 = vmatprep.subr.bf16.mxu0 0
    %86 = vmatpush1.bf16.msra.mxu0 0
    %87 = vmatprep.subr.bf16.mxu0 0
    %88 = vmatpush1.bf16.msra.mxu0 0
    %89 = vmatprep.subr.bf16.mxu0 0
    %90 = vmatpush1.bf16.msra.mxu0 0
    %91 = vmatprep.subr.bf16.mxu0 0
    %92 = vmatpush1.bf16.msra.mxu0 0
    %93 = vmatprep.subr.bf16.mxu0 0
    %94 = vmatpush1.bf16.msra.mxu0 0
    %95 = vmatprep.mubr.bf16.mxu0 0
    %96 = vmatmul.mubr.bf16.gmra.mrb[0].mxu0 %v61
    %v97 = vpop.f32.mrb[0].mxu0
    %v98 = vadd.f32 %v40, %v97
    %v99 = vpop.f32.mrb[0].mxu0
    %v100 = vpop.f32.mrb[0].mxu0
    %v101 = vadd.f32 %v40, %v100
    %v102 = vpop.f32.mrb[0].mxu0
    %103 = vdwg.mxu0
    %v104 = vmul.f32 %v98, 0.5
    %v105 = vmul.f32 %v101, 0.5
    %v106 = vmul.f32 %v98, 0.70710677
    %v107 = vmul.f32 %v101, 0.70710677
    %v108 = verf.f32.pop %v106
    %v109 = verf.f32.pop %v107
    %v110 = vadd.f32 %v108, 1.0
    %v111 = vadd.f32 %v109, 1.0
    %v112 = vmul.f32 %v104, %v110
    %v113 = vmul.f32 %v105, %v111
    %v114 = vld [vmem:[#allocation2] sm:$0xff]
    %v115 = vld [vmem:[#allocation2 + $0x8] sm:$0xff]
    %v116 = vpack.c.bf16 %v113, %v112
    %v117 = vld [vmem:[%s3] sm:$0xf]
    %v118 = vld [vmem:[%s3 + $0x4] sm:$0xf]
    %v119 = vld [vmem:[%s3 + $0x8] sm:$0xf]
    %v120 = vld [vmem:[%s3 + $0xc] sm:$0xf]
    %v121 = vld [vmem:[%s3 + $0x10] sm:$0xf]
    %v122 = vld [vmem:[%s3 + $0x14] sm:$0xf]
    %v123 = vld [vmem:[%s3 + $0x18] sm:$0xf]
    %v124 = vld [vmem:[%s3 + $0x1c] sm:$0xf]
    %v133 = vunpack.c.l.b16 %v117
    %v134 = vunpack.c.l.b16 %v118
    %v135 = vunpack.c.l.b16 %v119
    %v136 = vunpack.c.l.b16 %v120
    %v137 = vunpack.c.l.b16 %v121
    %v138 = vunpack.c.l.b16 %v122
    %v139 = vunpack.c.l.b16 %v123
    %v140 = vunpack.c.l.b16 %v124
    %v141 = vpack.c.b16 %v134, %v133
    %v142 = vpack.c.b16 %v136, %v135
    %v143 = vpack.c.b16 %v138, %v137
    %v144 = vpack.c.b16 %v140, %v139
    %vm149 = vcmask 523264
    %v151 = vsel %vm149, %v116, 0
    %153 = vmatprep.subr.bf16.mxu0 0
    %154 = vmatpush1.bf16.msra.mxu0 %v141
    %155 = vmatprep.subr.bf16.mxu0 0
    %156 = vmatpush1.bf16.msra.mxu0 %v142
    %157 = vmatprep.subr.bf16.mxu0 0
    %158 = vmatpush1.bf16.msra.mxu0 %v143
    %159 = vmatprep.subr.bf16.mxu0 0
    %160 = vmatpush1.bf16.msra.mxu0 %v144
    %161 = vmatprep.subr.bf16.mxu0 0
    %162 = vmatpush1.bf16.msra.mxu0 0
    %163 = vmatprep.subr.bf16.mxu0 0
    %164 = vmatpush1.bf16.msra.mxu0 0
    %165 = vmatprep.subr.bf16.mxu0 0
    %166 = vmatpush1.bf16.msra.mxu0 0
    %167 = vmatprep.subr.bf16.mxu0 0
    %168 = vmatpush1.bf16.msra.mxu0 0
    %169 = vmatprep.subr.bf16.mxu0 0
    %170 = vmatpush1.bf16.msra.mxu0 0
    %171 = vmatprep.subr.bf16.mxu0 0
    %172 = vmatpush1.bf16.msra.mxu0 0
    %173 = vmatprep.subr.bf16.mxu0 0
    %174 = vmatpush1.bf16.msra.mxu0 0
    %175 = vmatprep.subr.bf16.mxu0 0
    %176 = vmatpush1.bf16.msra.mxu0 0
    %177 = vmatprep.subr.bf16.mxu0 0
    %178 = vmatpush1.bf16.msra.mxu0 0
    %179 = vmatprep.subr.bf16.mxu0 0
    %180 = vmatpush1.bf16.msra.mxu0 0
    %181 = vmatprep.subr.bf16.mxu0 0
    %182 = vmatpush1.bf16.msra.mxu0 0
    %183 = vmatprep.subr.bf16.mxu0 0
    %184 = vmatpush1.bf16.msra.mxu0 0
    %185 = vmatprep.mubr.bf16.mxu0 0
    %186 = vmatmul.mubr.bf16.gmra.mrb[0].mxu0 %v151
    %v187 = vpop.f32.mrb[0].mxu0
    %v188 = vadd.f32 0.0, %v187
    %v189 = vpop.f32.mrb[0].mxu0
    %v190 = vpop.f32.mrb[0].mxu0
    %v191 = vadd.f32 0.0, %v190
    %v192 = vpop.f32.mrb[0].mxu0
    %193 = vdwg.mxu0
    %v194 = vadd.f32 %v114, %v188
    %v195 = vadd.f32 %v115, %v191
    %196 = vst.msk [vmem:[#allocation2] sm:$0xff] %vm59, %v194
    %197 = vst.msk [vmem:[#allocation2 + $0x8] sm:$0xff] %vm59, %v195
    // Predicated region
    $region26: #{mlp_pallas.1} parent=1 // pred_check
      %p198 = pneg %p22
    $region27: #{mlp_pallas.1} parent=1 // pred_check_branch
      %200 = sbr.rel (%p198) target = $region29
    $region28: #{mlp_pallas.1} parent=1 // pred_region
      %v201 = vld [vmem:[#allocation2] sm:$0xff]
      %v202 = vld [vmem:[#allocation2 + $0x8] sm:$0xff]
      %v203 = vld [vmem:[%s4] sm:$0x1]
      %v205 = vlaneseq
      %v206 = vshrl.u32 %v205, 7
      %v207 = vsub.s32 0, %v206
      %v208 = vrot.slane %v203, %v207
      %v210 = vadd.f32 %v201, %v208
      %v211 = vadd.f32 %v202, %v208
      %212 = vst.msk [vmem:[#allocation3] sm:$0xff] %vm59, %v210
      %213 = vst.msk [vmem:[#allocation3 + $0x8] sm:$0xff] %vm59, %v211
    $region29: #{mlp_pallas.1} parent=1 // pred_fallthru
      _
    // Predicated region
    $region30: #{mlp_pallas.1} parent=1 // pred_check
      _
    $region31: #{mlp_pallas.1} parent=1 // pred_check_branch
      %215 = sbr.rel (0) target = $region33
    $region32: #{mlp_pallas.1} parent=1 // pred_region
      %s217 = ssub.s32 256, 256
      %218 = vsyncadd [#allocation4], %s217
      %s219 = sshll.u32 [#allocation3], 4
      %s220 = int_to_ptr.vmem [resolvable:$true] %s219
      %225 = dma.vmem_to_hbm [thread:$0]  %s220, 256, %s5, [#allocation4], 128, 128, 8
    $region33: #{mlp_pallas.1} parent=1 // pred_fallthru
      _
    // Predicated region
    $region34: #{mlp_pallas.1} parent=1 // pred_check
      _
    $region35: #{mlp_pallas.1} parent=1 // pred_check_branch
      %227 = sbr.rel (0) target = $region37
    $region36: #{mlp_pallas.1} parent=1 // pred_region
      %228 = dma.done [#allocation4], 256
    $region37: #{mlp_pallas.1} parent=1 // pred_fallthru
      _
    %229 = vsyncpa [#allocation4], 1

</llo_original>
